<compile_context>
chip_gen: v7x
topology: tpu7x:2x2x1
jax: 0.10.0
libtpu: 0.0.40
codegen_flags: <defaults>
</compile_context>

<pallas_src>
import functools

import jax
import jax.numpy as jnp
from jax.experimental import pallas as pl
from jax.experimental.pallas import tpu as pltpu


def _shift_kernel(x_ref, o_ref, *, B, C, H, W, count, add, G, n_blocks):
    """x_ref: (B*C, H*W) resident input.  o_ref: (G*C, H*W) output block."""
    HW = H * W
    cc = count * count
    g = pl.program_id(0)

    # Hoisted once per invocation (not per slice): lane position within its
    # W-segment, used by the two-roll select for slices with sw != 0.
    lane_mod_w = jax.lax.broadcasted_iota(jnp.int32, (C, HW), 1) % W

    for gi in range(n_blocks):

        @pl.when(g == gi)
        def _block(gi=gi):
            for local in range(G):
                m = gi * G + local                        # absolute slice id (static)
                src = x_ref[pl.ds((m % B) * C, C), :]     # (C, HW), static offset
                if m < cc:
                    # torch.roll over (H, W): out[h, w] = src[(h-sh)%H, (w-sw)%W].
                    # On the flat lane axis this is roll by sh*W+sw for lanes with
                    # (lane % W) >= sw, and by sh*W+sw-W (mod HW) for the rest.
                    sh = ((m // count) * add) % H
                    sw = ((m % count) * add) % W
                    shift_hi = (sh * W + sw) % HW
                    if sw == 0:
                        out = src if shift_hi == 0 else pltpu.roll(src, shift_hi, 1)
                    else:
                        shift_lo = (shift_hi + HW - W) % HW
                        r_hi = pltpu.roll(src, shift_hi, 1)
                        r_lo = pltpu.roll(src, shift_lo, 1)
                        out = jnp.where(lane_mod_w >= sw, r_hi, r_lo)
                else:
                    out = src                             # duplicate slice: plain copy
                o_ref[pl.ds(local * C, C), :] = out


def shift(x, count_per_dim: int = 4, shift_per_dim: int = 4):
    assert x.ndim == 4
    B, C, H, W = x.shape
    HW = H * W
    cc = count_per_dim * count_per_dim
    NT = cc * B  # total output slices

    # Lane-dense layout: keep the flat H*W axis >= 128 so output stores are
    # full-lane vst's instead of masked W-wide partial stores.
    assert HW >= 128, "H*W < 128 would fall back to masked-lane stores"

    # Grid sizing: few, large output blocks (per-step fixed cost ~0.35us) but
    # at least 2 blocks so v7x's two TensorCores both get work; grow the block
    # count only if a block would exceed ~1 MiB.
    n_blocks = 2 if NT % 2 == 0 else 1
    slice_bytes = C * HW * x.dtype.itemsize
    while NT % (n_blocks * 2) == 0 and (NT // n_blocks) * slice_bytes > (1 << 20):
        n_blocks *= 2
    G = NT // n_blocks

    x2d = x.reshape(B * C, HW)  # contiguous NCHW reshape, metadata only

    kernel = functools.partial(
        _shift_kernel,
        B=B, C=C, H=H, W=W,
        count=count_per_dim, add=shift_per_dim,
        G=G, n_blocks=n_blocks,
    )
    in_bytes = B * C * HW * x.dtype.itemsize
    out_bytes = NT * C * HW * x.dtype.itemsize

    out2d = pl.pallas_call(
        kernel,
        grid=(n_blocks,),
        in_specs=[pl.BlockSpec((B * C, HW), lambda g: (0, 0))],   # VMEM-resident input
        out_specs=pl.BlockSpec((G * C, HW), lambda g: (g, 0)),
        out_shape=jax.ShapeDtypeStruct((NT * C, HW), x.dtype),
        compiler_params=pltpu.CompilerParams(
            dimension_semantics=("parallel",),
        ),
        cost_estimate=pl.CostEstimate(
            flops=0, transcendentals=0, bytes_accessed=in_bytes + out_bytes
        ),
    )(x2d)
    return out2d.reshape(NT, C, H, W)


def shift_ref(x, count_per_dim: int = 4, shift_per_dim: int = 4):
    # Pure-JAX reference with identical semantics to the PyTorch module.
    B, C, H, W = x.shape
    cc = count_per_dim * count_per_dim
    outs = []
    for m in range(cc * B):
        s = x[m % B]
        if m < cc:
            i, j = m // count_per_dim, m % count_per_dim
            s = jnp.roll(s, shift=(i * shift_per_dim, j * shift_per_dim), axis=(1, 2))
        outs.append(s)
    return jnp.stack(outs, axis=0)


if __name__ == "__main__":
    key = jax.random.PRNGKey(0)
    x = jax.random.normal(key, (2, 4, 16, 16), dtype=jnp.float32)  # (B, C, H, W)

    out = shift(x, count_per_dim=4, shift_per_dim=4)
    out = jax.block_until_ready(out)

    expected = shift_ref(x, count_per_dim=4, shift_per_dim=4)
    assert out.shape == (4 * 4 * 2, 4, 16, 16), out.shape
    assert out.dtype == x.dtype
    assert jnp.allclose(out, expected), "Pallas kernel mismatch vs reference"

    print("KERNEL_OK")
</pallas_src>

<mosaic_0001>
module attributes {stable_mosaic.version = 11 : i64} {
  func.func @_shift_kernel(%arg0: i32, %arg1: memref<8x256xf32, #tpu.memory_space<vmem>>, %arg2: memref<64x256xf32, #tpu.memory_space<vmem>>) attributes {dimension_semantics = [#tpu.dimension_semantics<parallel>], iteration_bounds = array<i64: 2>, scalar_prefetch = 0 : i64, scratch_operands = 0 : i64, tpu.core_type = #tpu.core_type<tc>, window_params = [{pipeline_mode = #tpu.pipeline_mode<synchronous>, transform_indices = @transform_0, window_bounds = array<i64: 8, 256>}, {transform_indices = @transform_1, window_bounds = array<i64: 64, 256>}]} {
    %0 = tpu.iota {dimensions = array<i32: 1>} : vector<4x256xi32>
    %c16_i32 = arith.constant 16 : i32
    %c0_i32 = arith.constant 0 : i32
    %1 = arith.cmpi eq, %c16_i32, %c0_i32 : i32
    %c1_i32 = arith.constant 1 : i32
    %2 = arith.select %1, %c1_i32, %c16_i32 : i32
    %3 = vector.broadcast %2 : i32 to vector<4x256xi32>
    %4 = arith.remsi %0, %3 : vector<4x256xi32>
    %c0_i32_0 = arith.constant 0 : i32
    %5 = vector.broadcast %c0_i32_0 : i32 to vector<4x256xi32>
    %6 = arith.cmpi ne, %4, %5 : vector<4x256xi32>
    %c0_i32_1 = arith.constant 0 : i32
    %7 = vector.broadcast %c0_i32_1 : i32 to vector<4x256xi32>
    %8 = arith.cmpi slt, %4, %7 : vector<4x256xi32>
    %c0_i32_2 = arith.constant 0 : i32
    %9 = arith.cmpi slt, %2, %c0_i32_2 : i32
    %10 = vector.broadcast %9 : i1 to vector<4x256xi1>
    %11 = vector.broadcast %10 : vector<4x256xi1> to vector<4x256xi1>
    %12 = arith.xori %8, %11 : vector<4x256xi1>
    %13 = arith.andi %12, %6 : vector<4x256xi1>
    %14 = vector.broadcast %2 : i32 to vector<4x256xi32>
    %15 = arith.addi %4, %14 : vector<4x256xi32>
    %16 = arith.select %13, %15, %4 : vector<4x256xi1>, vector<4x256xi32>
    %c0_i32_3 = arith.constant 0 : i32
    %17 = arith.cmpi eq, %arg0, %c0_i32_3 : i32
    %18 = arith.extui %17 : i1 to i32
    %c0_i32_4 = arith.constant 0 : i32
    %19 = arith.cmpi ne, %18, %c0_i32_4 : i32
    scf.if %19 {
      %c0 = arith.constant 0 : index
      %c0_7 = arith.constant 0 : index
      %23 = vector.load %arg1[%c0, %c0_7] : memref<8x256xf32, #tpu.memory_space<vmem>>, vector<4x256xf32>
      %c0_8 = arith.constant 0 : index
      %c0_9 = arith.constant 0 : index
      %24 = vector.load %arg2[%c0_8, %c0_9] : memref<64x256xf32, #tpu.memory_space<vmem>>, vector<4x256xf32>
      tpu.vector_store %arg2[%c0_8, %c0_9], %23 {strides = array<i32>} : memref<64x256xf32, #tpu.memory_space<vmem>>, vector<4x256xf32>,
      %c4 = arith.constant 4 : index
      %c0_10 = arith.constant 0 : index
      %25 = vector.load %arg1[%c4, %c0_10] : memref<8x256xf32, #tpu.memory_space<vmem>>, vector<4x256xf32>
      %c4_i32 = arith.constant 4 : i32
      %26 = tpu.dynamic_rotate %25 by %c4_i32 dim 1 : vector<4x256xf32>, i32 -> vector<4x256xf32>
      %c244_i32 = arith.constant 244 : i32
      %27 = tpu.dynamic_rotate %25 by %c244_i32 dim 1 : vector<4x256xf32>, i32 -> vector<4x256xf32>
      %c4_i32_11 = arith.constant 4 : i32
      %28 = vector.broadcast %c4_i32_11 : i32 to vector<4x256xi32>
      %29 = arith.cmpi sge, %16, %28 : vector<4x256xi32>
      %30 = arith.select %29, %26, %27 : vector<4x256xi1>, vector<4x256xf32>
      %c4_12 = arith.constant 4 : index
      %c0_13 = arith.constant 0 : index
      %31 = vector.load %arg2[%c4_12, %c0_13] : memref<64x256xf32, #tpu.memory_space<vmem>>, vector<4x256xf32>
      tpu.vector_store %arg2[%c4_12, %c0_13], %30 {strides = array<i32>} : memref<64x256xf32, #tpu.memory_space<vmem>>, vector<4x256xf32>,
      %c0_14 = arith.constant 0 : index
      %c0_15 = arith.constant 0 : index
      %32 = vector.load %arg1[%c0_14, %c0_15] : memref<8x256xf32, #tpu.memory_space<vmem>>, vector<4x256xf32>
      %c8_i32 = arith.constant 8 : i32
      %33 = tpu.dynamic_rotate %32 by %c8_i32 dim 1 : vector<4x256xf32>, i32 -> vector<4x256xf32>
      %c248_i32 = arith.constant 248 : i32
      %34 = tpu.dynamic_rotate %32 by %c248_i32 dim 1 : vector<4x256xf32>, i32 -> vector<4x256xf32>
      %c8_i32_16 = arith.constant 8 : i32
      %35 = vector.broadcast %c8_i32_16 : i32 to vector<4x256xi32>
      %36 = arith.cmpi sge, %16, %35 : vector<4x256xi32>
      %37 = arith.select %36, %33, %34 : vector<4x256xi1>, vector<4x256xf32>
      %c8 = arith.constant 8 : index
      %c0_17 = arith.constant 0 : index
      %38 = vector.load %arg2[%c8, %c0_17] : memref<64x256xf32, #tpu.memory_space<vmem>>, vector<4x256xf32>
      tpu.vector_store %arg2[%c8, %c0_17], %37 {strides = array<i32>} : memref<64x256xf32, #tpu.memory_space<vmem>>, vector<4x256xf32>,
      %c4_18 = arith.constant 4 : index
      %c0_19 = arith.constant 0 : index
      %39 = vector.load %arg1[%c4_18, %c0_19] : memref<8x256xf32, #tpu.memory_space<vmem>>, vector<4x256xf32>
      %c12_i32 = arith.constant 12 : i32
      %40 = tpu.dynamic_rotate %39 by %c12_i32 dim 1 : vector<4x256xf32>, i32 -> vector<4x256xf32>
      %c252_i32 = arith.constant 252 : i32
      %41 = tpu.dynamic_rotate %39 by %c252_i32 dim 1 : vector<4x256xf32>, i32 -> vector<4x256xf32>
      %c12_i32_20 = arith.constant 12 : i32
      %42 = vector.broadcast %c12_i32_20 : i32 to vector<4x256xi32>
      %43 = arith.cmpi sge, %16, %42 : vector<4x256xi32>
      %44 = arith.select %43, %40, %41 : vector<4x256xi1>, vector<4x256xf32>
      %c12 = arith.constant 12 : index
      %c0_21 = arith.constant 0 : index
      %45 = vector.load %arg2[%c12, %c0_21] : memref<64x256xf32, #tpu.memory_space<vmem>>, vector<4x256xf32>
      tpu.vector_store %arg2[%c12, %c0_21], %44 {strides = array<i32>} : memref<64x256xf32, #tpu.memory_space<vmem>>, vector<4x256xf32>,
      %c0_22 = arith.constant 0 : index
      %c0_23 = arith.constant 0 : index
      %46 = vector.load %arg1[%c0_22, %c0_23] : memref<8x256xf32, #tpu.memory_space<vmem>>, vector<4x256xf32>
      %c64_i32 = arith.constant 64 : i32
      %47 = tpu.dynamic_rotate %46 by %c64_i32 dim 1 : vector<4x256xf32>, i32 -> vector<4x256xf32>
      %c16 = arith.constant 16 : index
      %c0_24 = arith.constant 0 : index
      %48 = vector.load %arg2[%c16, %c0_24] : memref<64x256xf32, #tpu.memory_space<vmem>>, vector<4x256xf32>
      tpu.vector_store %arg2[%c16, %c0_24], %47 {strides = array<i32>} : memref<64x256xf32, #tpu.memory_space<vmem>>, vector<4x256xf32>,
      %c4_25 = arith.constant 4 : index
      %c0_26 = arith.constant 0 : index
      %49 = vector.load %arg1[%c4_25, %c0_26] : memref<8x256xf32, #tpu.memory_space<vmem>>, vector<4x256xf32>
      %c68_i32 = arith.constant 68 : i32
      %50 = tpu.dynamic_rotate %49 by %c68_i32 dim 1 : vector<4x256xf32>, i32 -> vector<4x256xf32>
      %c52_i32 = arith.constant 52 : i32
      %51 = tpu.dynamic_rotate %49 by %c52_i32 dim 1 : vector<4x256xf32>, i32 -> vector<4x256xf32>
      %c4_i32_27 = arith.constant 4 : i32
      %52 = vector.broadcast %c4_i32_27 : i32 to vector<4x256xi32>
      %53 = arith.cmpi sge, %16, %52 : vector<4x256xi32>
      %54 = arith.select %53, %50, %51 : vector<4x256xi1>, vector<4x256xf32>
      %c20 = arith.constant 20 : index
      %c0_28 = arith.constant 0 : index
      %55 = vector.load %arg2[%c20, %c0_28] : memref<64x256xf32, #tpu.memory_space<vmem>>, vector<4x256xf32>
      tpu.vector_store %arg2[%c20, %c0_28], %54 {strides = array<i32>} : memref<64x256xf32, #tpu.memory_space<vmem>>, vector<4x256xf32>,
      %c0_29 = arith.constant 0 : index
      %c0_30 = arith.constant 0 : index
      %56 = vector.load %arg1[%c0_29, %c0_30] : memref<8x256xf32, #tpu.memory_space<vmem>>, vector<4x256xf32>
      %c72_i32 = arith.constant 72 : i32
      %57 = tpu.dynamic_rotate %56 by %c72_i32 dim 1 : vector<4x256xf32>, i32 -> vector<4x256xf32>
      %c56_i32 = arith.constant 56 : i32
      %58 = tpu.dynamic_rotate %56 by %c56_i32 dim 1 : vector<4x256xf32>, i32 -> vector<4x256xf32>
      %c8_i32_31 = arith.constant 8 : i32
      %59 = vector.broadcast %c8_i32_31 : i32 to vector<4x256xi32>
      %60 = arith.cmpi sge, %16, %59 : vector<4x256xi32>
      %61 = arith.select %60, %57, %58 : vector<4x256xi1>, vector<4x256xf32>
      %c24 = arith.constant 24 : index
      %c0_32 = arith.constant 0 : index
      %62 = vector.load %arg2[%c24, %c0_32] : memref<64x256xf32, #tpu.memory_space<vmem>>, vector<4x256xf32>
      tpu.vector_store %arg2[%c24, %c0_32], %61 {strides = array<i32>} : memref<64x256xf32, #tpu.memory_space<vmem>>, vector<4x256xf32>,
      %c4_33 = arith.constant 4 : index
      %c0_34 = arith.constant 0 : index
      %63 = vector.load %arg1[%c4_33, %c0_34] : memref<8x256xf32, #tpu.memory_space<vmem>>, vector<4x256xf32>
      %c76_i32 = arith.constant 76 : i32
      %64 = tpu.dynamic_rotate %63 by %c76_i32 dim 1 : vector<4x256xf32>, i32 -> vector<4x256xf32>
      %c60_i32 = arith.constant 60 : i32
      %65 = tpu.dynamic_rotate %63 by %c60_i32 dim 1 : vector<4x256xf32>, i32 -> vector<4x256xf32>
      %c12_i32_35 = arith.constant 12 : i32
      %66 = vector.broadcast %c12_i32_35 : i32 to vector<4x256xi32>
      %67 = arith.cmpi sge, %16, %66 : vector<4x256xi32>
      %68 = arith.select %67, %64, %65 : vector<4x256xi1>, vector<4x256xf32>
      %c28 = arith.constant 28 : index
      %c0_36 = arith.constant 0 : index
      %69 = vector.load %arg2[%c28, %c0_36] : memref<64x256xf32, #tpu.memory_space<vmem>>, vector<4x256xf32>
      tpu.vector_store %arg2[%c28, %c0_36], %68 {strides = array<i32>} : memref<64x256xf32, #tpu.memory_space<vmem>>, vector<4x256xf32>,
      %c0_37 = arith.constant 0 : index
      %c0_38 = arith.constant 0 : index
      %70 = vector.load %arg1[%c0_37, %c0_38] : memref<8x256xf32, #tpu.memory_space<vmem>>, vector<4x256xf32>
      %c128_i32 = arith.constant 128 : i32
      %71 = tpu.dynamic_rotate %70 by %c128_i32 dim 1 : vector<4x256xf32>, i32 -> vector<4x256xf32>
      %c32 = arith.constant 32 : index
      %c0_39 = arith.constant 0 : index
      %72 = vector.load %arg2[%c32, %c0_39] : memref<64x256xf32, #tpu.memory_space<vmem>>, vector<4x256xf32>
      tpu.vector_store %arg2[%c32, %c0_39], %71 {strides = array<i32>} : memref<64x256xf32, #tpu.memory_space<vmem>>, vector<4x256xf32>,
      %c4_40 = arith.constant 4 : index
      %c0_41 = arith.constant 0 : index
      %73 = vector.load %arg1[%c4_40, %c0_41] : memref<8x256xf32, #tpu.memory_space<vmem>>, vector<4x256xf32>
      %c132_i32 = arith.constant 132 : i32
      %74 = tpu.dynamic_rotate %73 by %c132_i32 dim 1 : vector<4x256xf32>, i32 -> vector<4x256xf32>
      %c116_i32 = arith.constant 116 : i32
      %75 = tpu.dynamic_rotate %73 by %c116_i32 dim 1 : vector<4x256xf32>, i32 -> vector<4x256xf32>
      %c4_i32_42 = arith.constant 4 : i32
      %76 = vector.broadcast %c4_i32_42 : i32 to vector<4x256xi32>
      %77 = arith.cmpi sge, %16, %76 : vector<4x256xi32>
      %78 = arith.select %77, %74, %75 : vector<4x256xi1>, vector<4x256xf32>
      %c36 = arith.constant 36 : index
      %c0_43 = arith.constant 0 : index
      %79 = vector.load %arg2[%c36, %c0_43] : memref<64x256xf32, #tpu.memory_space<vmem>>, vector<4x256xf32>
      tpu.vector_store %arg2[%c36, %c0_43], %78 {strides = array<i32>} : memref<64x256xf32, #tpu.memory_space<vmem>>, vector<4x256xf32>,
      %c0_44 = arith.constant 0 : index
      %c0_45 = arith.constant 0 : index
      %80 = vector.load %arg1[%c0_44, %c0_45] : memref<8x256xf32, #tpu.memory_space<vmem>>, vector<4x256xf32>
      %c136_i32 = arith.constant 136 : i32
      %81 = tpu.dynamic_rotate %80 by %c136_i32 dim 1 : vector<4x256xf32>, i32 -> vector<4x256xf32>
      %c120_i32 = arith.constant 120 : i32
      %82 = tpu.dynamic_rotate %80 by %c120_i32 dim 1 : vector<4x256xf32>, i32 -> vector<4x256xf32>
      %c8_i32_46 = arith.constant 8 : i32
      %83 = vector.broadcast %c8_i32_46 : i32 to vector<4x256xi32>
      %84 = arith.cmpi sge, %16, %83 : vector<4x256xi32>
      %85 = arith.select %84, %81, %82 : vector<4x256xi1>, vector<4x256xf32>
      %c40 = arith.constant 40 : index
      %c0_47 = arith.constant 0 : index
      %86 = vector.load %arg2[%c40, %c0_47] : memref<64x256xf32, #tpu.memory_space<vmem>>, vector<4x256xf32>
      tpu.vector_store %arg2[%c40, %c0_47], %85 {strides = array<i32>} : memref<64x256xf32, #tpu.memory_space<vmem>>, vector<4x256xf32>,
      %c4_48 = arith.constant 4 : index
      %c0_49 = arith.constant 0 : index
      %87 = vector.load %arg1[%c4_48, %c0_49] : memref<8x256xf32, #tpu.memory_space<vmem>>, vector<4x256xf32>
      %c140_i32 = arith.constant 140 : i32
      %88 = tpu.dynamic_rotate %87 by %c140_i32 dim 1 : vector<4x256xf32>, i32 -> vector<4x256xf32>
      %c124_i32 = arith.constant 124 : i32
      %89 = tpu.dynamic_rotate %87 by %c124_i32 dim 1 : vector<4x256xf32>, i32 -> vector<4x256xf32>
      %c12_i32_50 = arith.constant 12 : i32
      %90 = vector.broadcast %c12_i32_50 : i32 to vector<4x256xi32>
      %91 = arith.cmpi sge, %16, %90 : vector<4x256xi32>
      %92 = arith.select %91, %88, %89 : vector<4x256xi1>, vector<4x256xf32>
      %c44 = arith.constant 44 : index
      %c0_51 = arith.constant 0 : index
      %93 = vector.load %arg2[%c44, %c0_51] : memref<64x256xf32, #tpu.memory_space<vmem>>, vector<4x256xf32>
      tpu.vector_store %arg2[%c44, %c0_51], %92 {strides = array<i32>} : memref<64x256xf32, #tpu.memory_space<vmem>>, vector<4x256xf32>,
      %c0_52 = arith.constant 0 : index
      %c0_53 = arith.constant 0 : index
      %94 = vector.load %arg1[%c0_52, %c0_53] : memref<8x256xf32, #tpu.memory_space<vmem>>, vector<4x256xf32>
      %c192_i32 = arith.constant 192 : i32
      %95 = tpu.dynamic_rotate %94 by %c192_i32 dim 1 : vector<4x256xf32>, i32 -> vector<4x256xf32>
      %c48 = arith.constant 48 : index
      %c0_54 = arith.constant 0 : index
      %96 = vector.load %arg2[%c48, %c0_54] : memref<64x256xf32, #tpu.memory_space<vmem>>, vector<4x256xf32>
      tpu.vector_store %arg2[%c48, %c0_54], %95 {strides = array<i32>} : memref<64x256xf32, #tpu.memory_space<vmem>>, vector<4x256xf32>,
      %c4_55 = arith.constant 4 : index
      %c0_56 = arith.constant 0 : index
      %97 = vector.load %arg1[%c4_55, %c0_56] : memref<8x256xf32, #tpu.memory_space<vmem>>, vector<4x256xf32>
      %c196_i32 = arith.constant 196 : i32
      %98 = tpu.dynamic_rotate %97 by %c196_i32 dim 1 : vector<4x256xf32>, i32 -> vector<4x256xf32>
      %c180_i32 = arith.constant 180 : i32
      %99 = tpu.dynamic_rotate %97 by %c180_i32 dim 1 : vector<4x256xf32>, i32 -> vector<4x256xf32>
      %c4_i32_57 = arith.constant 4 : i32
      %100 = vector.broadcast %c4_i32_57 : i32 to vector<4x256xi32>
      %101 = arith.cmpi sge, %16, %100 : vector<4x256xi32>
      %102 = arith.select %101, %98, %99 : vector<4x256xi1>, vector<4x256xf32>
      %c52 = arith.constant 52 : index
      %c0_58 = arith.constant 0 : index
      %103 = vector.load %arg2[%c52, %c0_58] : memref<64x256xf32, #tpu.memory_space<vmem>>, vector<4x256xf32>
      tpu.vector_store %arg2[%c52, %c0_58], %102 {strides = array<i32>} : memref<64x256xf32, #tpu.memory_space<vmem>>, vector<4x256xf32>,
      %c0_59 = arith.constant 0 : index
      %c0_60 = arith.constant 0 : index
      %104 = vector.load %arg1[%c0_59, %c0_60] : memref<8x256xf32, #tpu.memory_space<vmem>>, vector<4x256xf32>
      %c200_i32 = arith.constant 200 : i32
      %105 = tpu.dynamic_rotate %104 by %c200_i32 dim 1 : vector<4x256xf32>, i32 -> vector<4x256xf32>
      %c184_i32 = arith.constant 184 : i32
      %106 = tpu.dynamic_rotate %104 by %c184_i32 dim 1 : vector<4x256xf32>, i32 -> vector<4x256xf32>
      %c8_i32_61 = arith.constant 8 : i32
      %107 = vector.broadcast %c8_i32_61 : i32 to vector<4x256xi32>
      %108 = arith.cmpi sge, %16, %107 : vector<4x256xi32>
      %109 = arith.select %108, %105, %106 : vector<4x256xi1>, vector<4x256xf32>
      %c56 = arith.constant 56 : index
      %c0_62 = arith.constant 0 : index
      %110 = vector.load %arg2[%c56, %c0_62] : memref<64x256xf32, #tpu.memory_space<vmem>>, vector<4x256xf32>
      tpu.vector_store %arg2[%c56, %c0_62], %109 {strides = array<i32>} : memref<64x256xf32, #tpu.memory_space<vmem>>, vector<4x256xf32>,
      %c4_63 = arith.constant 4 : index
      %c0_64 = arith.constant 0 : index
      %111 = vector.load %arg1[%c4_63, %c0_64] : memref<8x256xf32, #tpu.memory_space<vmem>>, vector<4x256xf32>
      %c204_i32 = arith.constant 204 : i32
      %112 = tpu.dynamic_rotate %111 by %c204_i32 dim 1 : vector<4x256xf32>, i32 -> vector<4x256xf32>
      %c188_i32 = arith.constant 188 : i32
      %113 = tpu.dynamic_rotate %111 by %c188_i32 dim 1 : vector<4x256xf32>, i32 -> vector<4x256xf32>
      %c12_i32_65 = arith.constant 12 : i32
      %114 = vector.broadcast %c12_i32_65 : i32 to vector<4x256xi32>
      %115 = arith.cmpi sge, %16, %114 : vector<4x256xi32>
      %116 = arith.select %115, %112, %113 : vector<4x256xi1>, vector<4x256xf32>
      %c60 = arith.constant 60 : index
      %c0_66 = arith.constant 0 : index
      %117 = vector.load %arg2[%c60, %c0_66] : memref<64x256xf32, #tpu.memory_space<vmem>>, vector<4x256xf32>
      tpu.vector_store %arg2[%c60, %c0_66], %116 {strides = array<i32>} : memref<64x256xf32, #tpu.memory_space<vmem>>, vector<4x256xf32>,
    } else {
    }
    %c1_i32_5 = arith.constant 1 : i32
    %20 = arith.cmpi eq, %arg0, %c1_i32_5 : i32
    %21 = arith.extui %20 : i1 to i32
    %c0_i32_6 = arith.constant 0 : i32
    %22 = arith.cmpi ne, %21, %c0_i32_6 : i32
    scf.if %22 {
      %c0 = arith.constant 0 : index
      %c0_7 = arith.constant 0 : index
      %23 = vector.load %arg1[%c0, %c0_7] : memref<8x256xf32, #tpu.memory_space<vmem>>, vector<4x256xf32>
      %c0_8 = arith.constant 0 : index
      %c0_9 = arith.constant 0 : index
      %24 = vector.load %arg2[%c0_8, %c0_9] : memref<64x256xf32, #tpu.memory_space<vmem>>, vector<4x256xf32>
      tpu.vector_store %arg2[%c0_8, %c0_9], %23 {strides = array<i32>} : memref<64x256xf32, #tpu.memory_space<vmem>>, vector<4x256xf32>,
      %c4 = arith.constant 4 : index
      %c0_10 = arith.constant 0 : index
      %25 = vector.load %arg1[%c4, %c0_10] : memref<8x256xf32, #tpu.memory_space<vmem>>, vector<4x256xf32>
      %c4_11 = arith.constant 4 : index
      %c0_12 = arith.constant 0 : index
      %26 = vector.load %arg2[%c4_11, %c0_12] : memref<64x256xf32, #tpu.memory_space<vmem>>, vector<4x256xf32>
      tpu.vector_store %arg2[%c4_11, %c0_12], %25 {strides = array<i32>} : memref<64x256xf32, #tpu.memory_space<vmem>>, vector<4x256xf32>,
      %c0_13 = arith.constant 0 : index
      %c0_14 = arith.constant 0 : index
      %27 = vector.load %arg1[%c0_13, %c0_14] : memref<8x256xf32, #tpu.memory_space<vmem>>, vector<4x256xf32>
      %c8 = arith.constant 8 : index
      %c0_15 = arith.constant 0 : index
      %28 = vector.load %arg2[%c8, %c0_15] : memref<64x256xf32, #tpu.memory_space<vmem>>, vector<4x256xf32>
      tpu.vector_store %arg2[%c8, %c0_15], %27 {strides = array<i32>} : memref<64x256xf32, #tpu.memory_space<vmem>>, vector<4x256xf32>,
      %c4_16 = arith.constant 4 : index
      %c0_17 = arith.constant 0 : index
      %29 = vector.load %arg1[%c4_16, %c0_17] : memref<8x256xf32, #tpu.memory_space<vmem>>, vector<4x256xf32>
      %c12 = arith.constant 12 : index
      %c0_18 = arith.constant 0 : index
      %30 = vector.load %arg2[%c12, %c0_18] : memref<64x256xf32, #tpu.memory_space<vmem>>, vector<4x256xf32>
      tpu.vector_store %arg2[%c12, %c0_18], %29 {strides = array<i32>} : memref<64x256xf32, #tpu.memory_space<vmem>>, vector<4x256xf32>,
      %c0_19 = arith.constant 0 : index
      %c0_20 = arith.constant 0 : index
      %31 = vector.load %arg1[%c0_19, %c0_20] : memref<8x256xf32, #tpu.memory_space<vmem>>, vector<4x256xf32>
      %c16 = arith.constant 16 : index
      %c0_21 = arith.constant 0 : index
      %32 = vector.load %arg2[%c16, %c0_21] : memref<64x256xf32, #tpu.memory_space<vmem>>, vector<4x256xf32>
      tpu.vector_store %arg2[%c16, %c0_21], %31 {strides = array<i32>} : memref<64x256xf32, #tpu.memory_space<vmem>>, vector<4x256xf32>,
      %c4_22 = arith.constant 4 : index
      %c0_23 = arith.constant 0 : index
      %33 = vector.load %arg1[%c4_22, %c0_23] : memref<8x256xf32, #tpu.memory_space<vmem>>, vector<4x256xf32>
      %c20 = arith.constant 20 : index
      %c0_24 = arith.constant 0 : index
      %34 = vector.load %arg2[%c20, %c0_24] : memref<64x256xf32, #tpu.memory_space<vmem>>, vector<4x256xf32>
      tpu.vector_store %arg2[%c20, %c0_24], %33 {strides = array<i32>} : memref<64x256xf32, #tpu.memory_space<vmem>>, vector<4x256xf32>,
      %c0_25 = arith.constant 0 : index
      %c0_26 = arith.constant 0 : index
      %35 = vector.load %arg1[%c0_25, %c0_26] : memref<8x256xf32, #tpu.memory_space<vmem>>, vector<4x256xf32>
      %c24 = arith.constant 24 : index
      %c0_27 = arith.constant 0 : index
      %36 = vector.load %arg2[%c24, %c0_27] : memref<64x256xf32, #tpu.memory_space<vmem>>, vector<4x256xf32>
      tpu.vector_store %arg2[%c24, %c0_27], %35 {strides = array<i32>} : memref<64x256xf32, #tpu.memory_space<vmem>>, vector<4x256xf32>,
      %c4_28 = arith.constant 4 : index
      %c0_29 = arith.constant 0 : index
      %37 = vector.load %arg1[%c4_28, %c0_29] : memref<8x256xf32, #tpu.memory_space<vmem>>, vector<4x256xf32>
      %c28 = arith.constant 28 : index
      %c0_30 = arith.constant 0 : index
      %38 = vector.load %arg2[%c28, %c0_30] : memref<64x256xf32, #tpu.memory_space<vmem>>, vector<4x256xf32>
      tpu.vector_store %arg2[%c28, %c0_30], %37 {strides = array<i32>} : memref<64x256xf32, #tpu.memory_space<vmem>>, vector<4x256xf32>,
      %c0_31 = arith.constant 0 : index
      %c0_32 = arith.constant 0 : index
      %39 = vector.load %arg1[%c0_31, %c0_32] : memref<8x256xf32, #tpu.memory_space<vmem>>, vector<4x256xf32>
      %c32 = arith.constant 32 : index
      %c0_33 = arith.constant 0 : index
      %40 = vector.load %arg2[%c32, %c0_33] : memref<64x256xf32, #tpu.memory_space<vmem>>, vector<4x256xf32>
      tpu.vector_store %arg2[%c32, %c0_33], %39 {strides = array<i32>} : memref<64x256xf32, #tpu.memory_space<vmem>>, vector<4x256xf32>,
      %c4_34 = arith.constant 4 : index
      %c0_35 = arith.constant 0 : index
      %41 = vector.load %arg1[%c4_34, %c0_35] : memref<8x256xf32, #tpu.memory_space<vmem>>, vector<4x256xf32>
      %c36 = arith.constant 36 : index
      %c0_36 = arith.constant 0 : index
      %42 = vector.load %arg2[%c36, %c0_36] : memref<64x256xf32, #tpu.memory_space<vmem>>, vector<4x256xf32>
      tpu.vector_store %arg2[%c36, %c0_36], %41 {strides = array<i32>} : memref<64x256xf32, #tpu.memory_space<vmem>>, vector<4x256xf32>,
      %c0_37 = arith.constant 0 : index
      %c0_38 = arith.constant 0 : index
      %43 = vector.load %arg1[%c0_37, %c0_38] : memref<8x256xf32, #tpu.memory_space<vmem>>, vector<4x256xf32>
      %c40 = arith.constant 40 : index
      %c0_39 = arith.constant 0 : index
      %44 = vector.load %arg2[%c40, %c0_39] : memref<64x256xf32, #tpu.memory_space<vmem>>, vector<4x256xf32>
      tpu.vector_store %arg2[%c40, %c0_39], %43 {strides = array<i32>} : memref<64x256xf32, #tpu.memory_space<vmem>>, vector<4x256xf32>,
      %c4_40 = arith.constant 4 : index
      %c0_41 = arith.constant 0 : index
      %45 = vector.load %arg1[%c4_40, %c0_41] : memref<8x256xf32, #tpu.memory_space<vmem>>, vector<4x256xf32>
      %c44 = arith.constant 44 : index
      %c0_42 = arith.constant 0 : index
      %46 = vector.load %arg2[%c44, %c0_42] : memref<64x256xf32, #tpu.memory_space<vmem>>, vector<4x256xf32>
      tpu.vector_store %arg2[%c44, %c0_42], %45 {strides = array<i32>} : memref<64x256xf32, #tpu.memory_space<vmem>>, vector<4x256xf32>,
      %c0_43 = arith.constant 0 : index
      %c0_44 = arith.constant 0 : index
      %47 = vector.load %arg1[%c0_43, %c0_44] : memref<8x256xf32, #tpu.memory_space<vmem>>, vector<4x256xf32>
      %c48 = arith.constant 48 : index
      %c0_45 = arith.constant 0 : index
      %48 = vector.load %arg2[%c48, %c0_45] : memref<64x256xf32, #tpu.memory_space<vmem>>, vector<4x256xf32>
      tpu.vector_store %arg2[%c48, %c0_45], %47 {strides = array<i32>} : memref<64x256xf32, #tpu.memory_space<vmem>>, vector<4x256xf32>,
      %c4_46 = arith.constant 4 : index
      %c0_47 = arith.constant 0 : index
      %49 = vector.load %arg1[%c4_46, %c0_47] : memref<8x256xf32, #tpu.memory_space<vmem>>, vector<4x256xf32>
      %c52 = arith.constant 52 : index
      %c0_48 = arith.constant 0 : index
      %50 = vector.load %arg2[%c52, %c0_48] : memref<64x256xf32, #tpu.memory_space<vmem>>, vector<4x256xf32>
      tpu.vector_store %arg2[%c52, %c0_48], %49 {strides = array<i32>} : memref<64x256xf32, #tpu.memory_space<vmem>>, vector<4x256xf32>,
      %c0_49 = arith.constant 0 : index
      %c0_50 = arith.constant 0 : index
      %51 = vector.load %arg1[%c0_49, %c0_50] : memref<8x256xf32, #tpu.memory_space<vmem>>, vector<4x256xf32>
      %c56 = arith.constant 56 : index
      %c0_51 = arith.constant 0 : index
      %52 = vector.load %arg2[%c56, %c0_51] : memref<64x256xf32, #tpu.memory_space<vmem>>, vector<4x256xf32>
      tpu.vector_store %arg2[%c56, %c0_51], %51 {strides = array<i32>} : memref<64x256xf32, #tpu.memory_space<vmem>>, vector<4x256xf32>,
      %c4_52 = arith.constant 4 : index
      %c0_53 = arith.constant 0 : index
      %53 = vector.load %arg1[%c4_52, %c0_53] : memref<8x256xf32, #tpu.memory_space<vmem>>, vector<4x256xf32>
      %c60 = arith.constant 60 : index
      %c0_54 = arith.constant 0 : index
      %54 = vector.load %arg2[%c60, %c0_54] : memref<64x256xf32, #tpu.memory_space<vmem>>, vector<4x256xf32>
      tpu.vector_store %arg2[%c60, %c0_54], %53 {strides = array<i32>} : memref<64x256xf32, #tpu.memory_space<vmem>>, vector<4x256xf32>,
    } else {
    }
    return
  }
  func.func @transform_0(%arg0: i32) -> (i32, i32) {
    %c0_i32 = arith.constant 0 : i32
    %c0_i32_0 = arith.constant 0 : i32
    %c0_i32_1 = arith.constant 0 : i32
    return %c0_i32, %c0_i32_0 : i32, i32
  }
  func.func @transform_1(%arg0: i32) -> (i32, i32) {
    %c0_i32 = arith.constant 0 : i32
    %c0_i32_0 = arith.constant 0 : i32
    return %arg0, %c0_i32 : i32, i32
  }
}

</mosaic_0001>

<llo_original>
// kernel: tpu_custom_call.1
$region0: #{tpu_custom_call.1}
  #allocation0 [shape = 'u32[]', space=smem, size = 0x4, offset = 0x4, fixed_abs, tag = 'smem constant byte address 0x4 - core index']
  #allocation1 [shape = 'u32[144,128]{1,0:T(1,128)}', space=vmem, size = 0x12000, scoped, tag = 'internal scratch']
  %s0 = inlined_call_operand.hbm [shape: f32[8,256], index: 0, kind: input, shape index: {}]
  %s1 = inlined_call_operand.hbm [shape: f32[128,256], index: 1, kind: output, shape index: {}]
  %s2 = sld [smem:[#allocation0]]
  $region49: #{tpu_custom_call.1} parent=0
    _
  %s4 = ssub.s32 1, %s2
  %s5 = scalar_select 0, %s4, %s2
  $region1: #{tpu_custom_call.1} parent=0
    #allocation2 [shape = 'u8[8192]{0}', space=vmem, size = 0x2000, scoped, tag = 'input window, operand 0, single buffered']
    #allocation3 [shape = 's32[2]{0}', space=sflag, size = 0x8, scoped, tag = 'scoped memory for tpu_custom_call.1']
    #allocation4 [shape = 's32[2]{0}', space=sflag, size = 0x8, scoped, tag = 'scoped memory for tpu_custom_call.1']
    #allocation5 [shape = 'u8[131072]{0}', space=vmem, size = 0x20000, scoped, tag = 'output window, operand 0']
    %6 = vsyncpa [#allocation3], 0
    %7 = vsyncpa [#allocation4], 0
    %s8 = scalar_lea.sflag [#allocation4], 1
    %9 = vsyncpa %s8, 0
    loop: start=0, step=1, limit=4
    $region2: #{tpu_custom_call.1} parent=1 // loop_pre_header
      _
    $region3: #{tpu_custom_call.1} parent=1 // loop_header
      %s11 = sphi 0, %s15
      %p12 = scmp.ge.s32.totalorder %s11, 4
      %s19 = sphi 0, %s19
      %s21 = sphi 0, %s19
      %s22 = sphi 0, %s21
      %s36 = sphi 0, %s22
      %s42 = sphi 0, %s44
      %s45 = sphi 0, %s42
      %s46 = sphi 0, %s45
      %s62 = sphi 0, %s46
    $region4: #{tpu_custom_call.1} parent=1 // loop_header_branch
      %14 = sbr.rel (%p12) target = $region8
    $region5: #{tpu_custom_call.1} parent=1 // loop_body
      %s16 = ssub.s32 %s11, 1
      %s17 = ssub.s32 %s11, 2
      %s18 = sadd.s32 %s11, 1
      %s20 = sadd.s32 %s19, 1
      %p23 = scmp.eq.s32.totalorder %s11, 1
      %p24 = scmp.ne.s32.totalorder %s19, %s21
      %p25 = scmp.eq.s32.totalorder %s11, 0
      %p26 = por %p24, %p25
      %p27 = scmp.ne.s32.totalorder %s19, %s21
      %p28 = scmp.eq.s32.totalorder %s16, 1
      %p29 = por %p27, %p28
      %p30 = scmp.ne.s32.totalorder %s21, %s22
      %p31 = scmp.eq.s32.totalorder %s16, 0
      %p32 = por %p30, %p31
      %p33 = scmp.ne.s32.totalorder %s21, %s22
      %p34 = scmp.eq.s32.totalorder %s17, 1
      %p35 = por %p33, %p34
      %p37 = scmp.ne.s32.totalorder %s22, %s36
      %p38 = scmp.eq.s32.totalorder %s17, 0
      %p39 = por %p37, %p38
      %s40 = ssub.s32 %s11, %s18
      %p41 = scmp.eq.s32.totalorder %s40, 0
      %s43 = sadd.s32 %s42, 1
      %s44 = scalar_select %p41, %s42, %s43
      %p47 = pneg %p41
      %p48 = scmp.eq.s32.totalorder %s11, 1
      %p49 = por %p47, %p48
      %p50 = scmp.ne.s32.totalorder %s42, %s45
      %p51 = scmp.eq.s32.totalorder %s11, 0
      %p52 = por %p50, %p51
      %p53 = scmp.ne.s32.totalorder %s42, %s45
      %p54 = scmp.eq.s32.totalorder %s16, 1
      %p55 = por %p53, %p54
      %p56 = scmp.ne.s32.totalorder %s45, %s46
      %p57 = scmp.eq.s32.totalorder %s16, 0
      %p58 = por %p56, %p57
      %p59 = scmp.ne.s32.totalorder %s45, %s46
      %p60 = scmp.eq.s32.totalorder %s17, 1
      %p61 = por %p59, %p60
      %p63 = scmp.ne.s32.totalorder %s46, %s62
      %p64 = scmp.eq.s32.totalorder %s17, 0
      %p65 = por %p63, %p64
      %p66 = scmp.le.s32.totalorder 1, %s11
      %p67 = scmp.lt.s32.totalorder %s11, 3
      %p68 = pnand %p66, %p67
      %p69 = pneg %p68
      // Predicated region
      $region9: #{tpu_custom_call.1} parent=5 // pred_check
        _
      $region10: #{tpu_custom_call.1} parent=5 // pred_check_branch
        %71 = sbr.rel (%p68) target = $region12
      $region11: #{tpu_custom_call.1} parent=5 // pred_region
        %s72 = ssub.s32 %s11, 1
        // Predicated region
        $region13: #{tpu_custom_call.1} parent=11 // pred_check
          %p73 = pneg %p32
        $region14: #{tpu_custom_call.1} parent=11 // pred_check_branch
          %75 = sbr.rel (%p73) target = $region16
        $region15: #{tpu_custom_call.1} parent=11 // pred_region
          %s77 = ssub.s32 256, 256
          %78 = vsyncadd [#allocation3], %s77
          %s80 = sshll.u32 [#allocation2], 4
          %s81 = int_to_ptr.vmem [resolvable:$true] %s80
          %83 = dma.hbm_to_vmem [thread:$0]  %s0, 256, %s81, [#allocation3]
        $region16: #{tpu_custom_call.1} parent=11 // pred_fallthru
          _
      $region12: #{tpu_custom_call.1} parent=5 // pred_fallthru
        _
      %p84 = scmp.lt.s32.totalorder %s11, 2
      // Predicated region
      $region17: #{tpu_custom_call.1} parent=5 // pred_check
        %p85 = pneg %p84
      $region18: #{tpu_custom_call.1} parent=5 // pred_check_branch
        %87 = sbr.rel (%p85) target = $region20
      $region19: #{tpu_custom_call.1} parent=5 // pred_region
        _
      $region20: #{tpu_custom_call.1} parent=5 // pred_fallthru
        _
      %p88 = scmp.le.s32.totalorder 1, %s11
      %p89 = scmp.lt.s32.totalorder %s11, 3
      %p90 = pnand %p88, %p89
      %p91 = pneg %p90
      // Predicated region
      $region21: #{tpu_custom_call.1} parent=5 // pred_check
        _
      $region22: #{tpu_custom_call.1} parent=5 // pred_check_branch
        %93 = sbr.rel (%p90) target = $region24
      $region23: #{tpu_custom_call.1} parent=5 // pred_region
        %s94 = ssub.s32 %s11, 1
        // Predicated region
        $region25: #{tpu_custom_call.1} parent=23 // pred_check
          %p95 = pneg %p32
        $region26: #{tpu_custom_call.1} parent=23 // pred_check_branch
          %97 = sbr.rel (%p95) target = $region28
        $region27: #{tpu_custom_call.1} parent=23 // pred_region
          %98 = dma.done [#allocation3], 256
        $region28: #{tpu_custom_call.1} parent=23 // pred_fallthru
          _
        %p99 = pneg %p32
        %p100 = pneg %p29
        %p101 = pneg %p58
        %p102 = pneg %p55
        %s103 = sand.u32 %s45, 1
        %s104 = scalar_lea.sflag [#allocation4], %s103
        %s105 = sand.u32 %s45, 1
        %s106 = smul.addr %s105, 128
        %s107 = scalar_lea.vmem [#allocation5], %s106
        %s108 = smul.u32 8, %s16
        %v109 = vlaneseq
        %v110 = vand.u32 %v109, 127
        %v111 = vadd.s32 %v110, 128
        %vm112 = vcmp.lt.s32.totalorder %v110, 0
        %v113 = vsub.s32 0, %v110
        %v114 = vsel %vm112, %v113, %v110
        %v115 = vshrl.u32 %v114, 4
        %v116 = vand.u32 %v114, 15
        %v117 = vsub.s32 0, %v116
        %v118 = vsel %vm112, %v117, %v116
        %vm119 = vcmp.lt.s32.totalorder %v111, 0
        %v120 = vsub.s32 0, %v111
        %v121 = vsel %vm119, %v120, %v111
        %v122 = vshrl.u32 %v121, 4
        %v123 = vand.u32 %v121, 15
        %v124 = vsub.s32 0, %v123
        %v125 = vsel %vm119, %v124, %v123
        %vm126 = vcmp.ne.s32.totalorder %v118, 0
        %vm127 = vcmp.ne.s32.totalorder %v125, 0
        %vm128 = vcmp.lt.s32.totalorder %v118, 0
        %vm129 = vcmp.lt.s32.totalorder %v125, 0
        %vm130 = vmand %vm128, %vm126
        %vm131 = vmand %vm129, %vm127
        %v132 = vadd.s32 %v118, 16
        %v133 = vadd.s32 %v125, 16
        %v134 = vsel %vm130, %v132, %v118
        %v135 = vsel %vm131, %v133, %v125
        %p136 = scmp.eq.s32.totalorder %s16, 0
        // Predicated region
        $region29: #{tpu_custom_call.1} parent=23 // pred_check
          %p137 = pneg %p136
        $region30: #{tpu_custom_call.1} parent=23 // pred_check_branch
          %139 = sbr.rel (%p137) target = $region32
        $region31: #{tpu_custom_call.1} parent=23 // pred_region
          %v140 = vld [vmem:[#allocation2] sm:$0xf]
          %v141 = vld [vmem:[#allocation2 + $0x8] sm:$0xf]
          %142 = vst [vmem:[%s107] sm:$0xf] %v140
          %143 = vst [vmem:[%s107 + $0x8] sm:$0xf] %v141
          %v144 = vld [vmem:[#allocation2] sm:$0xf0]
          %v145 = vld [vmem:[#allocation2 + $0x8] sm:$0xf0]
          %v148 = vrot.slane %v144, 4
          %v149 = vrot.slane %v145, 4
          %152 = vrot.lane.b32.xlu0 %v148, 4
          %v153 = vpop.permute.xlu0 %152
          %154 = vrot.lane.b32.xlu0 %v149, 4
          %v155 = vpop.permute.xlu0 %154
          %vm156 = vcmp.lt.s32.totalorder %v110, 4
          %v157 = vsel %vm156, %v153, %v155
          %v158 = vsel %vm156, %v155, %v153
          %159 = vrot.lane.b32.xlu0 %v148, 116
          %v160 = vpop.permute.xlu0 %159
          %161 = vrot.lane.b32.xlu0 %v149, 116
          %v162 = vpop.permute.xlu0 %161
          %vm163 = vcmp.lt.s32.totalorder %v110, 116
          %v164 = vsel %vm163, %v160, %v162
          %v165 = vsel %vm163, %v162, %v160
          %vm166 = vcmp.ge.s32.totalorder %v134, 4
          %vm167 = vcmp.ge.s32.totalorder %v135, 4
          %v168 = vsel %vm166, %v158, %v164
          %v169 = vsel %vm167, %v157, %v165
          %v172 = vrot.slane %v168, 4
          %v173 = vrot.slane %v169, 4
          %176 = vst [vmem:[%s107] sm:$0xf0] %v172
          %177 = vst [vmem:[%s107 + $0x8] sm:$0xf0] %v173
          %v178 = vld [vmem:[#allocation2] sm:$0xf]
          %v179 = vld [vmem:[#allocation2 + $0x8] sm:$0xf]
          %180 = vrot.lane.b32.xlu0 %v178, 8
          %v181 = vpop.permute.xlu0 %180
          %182 = vrot.lane.b32.xlu0 %v179, 8
          %v183 = vpop.permute.xlu0 %182
          %vm184 = vcmp.lt.s32.totalorder %v110, 8
          %v185 = vsel %vm184, %v181, %v183
          %v186 = vsel %vm184, %v183, %v181
          %187 = vrot.lane.b32.xlu0 %v178, 120
          %v188 = vpop.permute.xlu0 %187
          %189 = vrot.lane.b32.xlu0 %v179, 120
          %v190 = vpop.permute.xlu0 %189
          %vm191 = vcmp.lt.s32.totalorder %v110, 120
          %v192 = vsel %vm191, %v188, %v190
          %v193 = vsel %vm191, %v190, %v188
          %vm194 = vcmp.ge.s32.totalorder %v134, 8
          %vm195 = vcmp.ge.s32.totalorder %v135, 8
          %v196 = vsel %vm194, %v186, %v192
          %v197 = vsel %vm195, %v185, %v193
          %198 = vst [vmem:[%s107 + $0x10] sm:$0xf] %v196
          %199 = vst [vmem:[%s107 + $0x18] sm:$0xf] %v197
          %v200 = vld [vmem:[#allocation2] sm:$0xf0]
          %v201 = vld [vmem:[#allocation2 + $0x8] sm:$0xf0]
          %v204 = vrot.slane %v200, 4
          %v205 = vrot.slane %v201, 4
          %208 = vrot.lane.b32.xlu0 %v204, 12
          %v209 = vpop.permute.xlu0 %208
          %210 = vrot.lane.b32.xlu0 %v205, 12
          %v211 = vpop.permute.xlu0 %210
          %vm212 = vcmp.lt.s32.totalorder %v110, 12
          %v213 = vsel %vm212, %v209, %v211
          %v214 = vsel %vm212, %v211, %v209
          %215 = vrot.lane.b32.xlu0 %v204, 124
          %v216 = vpop.permute.xlu0 %215
          %217 = vrot.lane.b32.xlu0 %v205, 124
          %v218 = vpop.permute.xlu0 %217
          %vm219 = vcmp.lt.s32.totalorder %v110, 124
          %v220 = vsel %vm219, %v216, %v218
          %v221 = vsel %vm219, %v218, %v216
          %vm222 = vcmp.ge.s32.totalorder %v134, 12
          %vm223 = vcmp.ge.s32.totalorder %v135, 12
          %v224 = vsel %vm222, %v214, %v220
          %v225 = vsel %vm223, %v213, %v221
          %v228 = vrot.slane %v224, 4
          %v229 = vrot.slane %v225, 4
          %232 = vst [vmem:[%s107 + $0x10] sm:$0xf0] %v228
          %233 = vst [vmem:[%s107 + $0x18] sm:$0xf0] %v229
          %v234 = vld [vmem:[#allocation2] sm:$0xf]
          %v235 = vld [vmem:[#allocation2 + $0x8] sm:$0xf]
          %236 = vrot.lane.b32.xlu0 %v234, 64
          %v237 = vpop.permute.xlu0 %236
          %238 = vrot.lane.b32.xlu0 %v235, 64
          %v239 = vpop.permute.xlu0 %238
          %vm240 = vcmp.lt.s32.totalorder %v110, 64
          %v241 = vsel %vm240, %v237, %v239
          %v242 = vsel %vm240, %v239, %v237
          %243 = vst [vmem:[%s107 + $0x20] sm:$0xf] %v242
          %244 = vst [vmem:[%s107 + $0x28] sm:$0xf] %v241
          %v245 = vld [vmem:[#allocation2] sm:$0xf0]
          %v246 = vld [vmem:[#allocation2 + $0x8] sm:$0xf0]
          %v249 = vrot.slane %v245, 4
          %v250 = vrot.slane %v246, 4
          %253 = vrot.lane.b32.xlu0 %v249, 68
          %v254 = vpop.permute.xlu0 %253
          %255 = vrot.lane.b32.xlu0 %v250, 68
          %v256 = vpop.permute.xlu0 %255
          %vm257 = vcmp.lt.s32.totalorder %v110, 68
          %v258 = vsel %vm257, %v254, %v256
          %v259 = vsel %vm257, %v256, %v254
          %260 = vrot.lane.b32.xlu0 %v249, 52
          %v261 = vpop.permute.xlu0 %260
          %262 = vrot.lane.b32.xlu0 %v250, 52
          %v263 = vpop.permute.xlu0 %262
          %vm264 = vcmp.lt.s32.totalorder %v110, 52
          %v265 = vsel %vm264, %v261, %v263
          %v266 = vsel %vm264, %v263, %v261
          %v267 = vsel %vm166, %v259, %v266
          %v268 = vsel %vm167, %v258, %v265
          %v271 = vrot.slane %v267, 4
          %v272 = vrot.slane %v268, 4
          %275 = vst [vmem:[%s107 + $0x20] sm:$0xf0] %v271
          %276 = vst [vmem:[%s107 + $0x28] sm:$0xf0] %v272
          %v277 = vld [vmem:[#allocation2] sm:$0xf]
          %v278 = vld [vmem:[#allocation2 + $0x8] sm:$0xf]
          %279 = vrot.lane.b32.xlu0 %v277, 72
          %v280 = vpop.permute.xlu0 %279
          %281 = vrot.lane.b32.xlu0 %v278, 72
          %v282 = vpop.permute.xlu0 %281
          %vm283 = vcmp.lt.s32.totalorder %v110, 72
          %v284 = vsel %vm283, %v280, %v282
          %v285 = vsel %vm283, %v282, %v280
          %286 = vrot.lane.b32.xlu0 %v277, 56
          %v287 = vpop.permute.xlu0 %286
          %288 = vrot.lane.b32.xlu0 %v278, 56
          %v289 = vpop.permute.xlu0 %288
          %vm290 = vcmp.lt.s32.totalorder %v110, 56
          %v291 = vsel %vm290, %v287, %v289
          %v292 = vsel %vm290, %v289, %v287
          %v293 = vsel %vm194, %v285, %v292
          %v294 = vsel %vm195, %v284, %v291
          %295 = vst [vmem:[%s107 + $0x30] sm:$0xf] %v293
          %296 = vst [vmem:[%s107 + $0x38] sm:$0xf] %v294
          %v297 = vld [vmem:[#allocation2] sm:$0xf0]
          %v298 = vld [vmem:[#allocation2 + $0x8] sm:$0xf0]
          %v301 = vrot.slane %v297, 4
          %v302 = vrot.slane %v298, 4
          %305 = vrot.lane.b32.xlu0 %v301, 76
          %v306 = vpop.permute.xlu0 %305
          %307 = vrot.lane.b32.xlu0 %v302, 76
          %v308 = vpop.permute.xlu0 %307
          %vm309 = vcmp.lt.s32.totalorder %v110, 76
          %v310 = vsel %vm309, %v306, %v308
          %v311 = vsel %vm309, %v308, %v306
          %312 = vrot.lane.b32.xlu0 %v301, 60
          %v313 = vpop.permute.xlu0 %312
          %314 = vrot.lane.b32.xlu0 %v302, 60
          %v315 = vpop.permute.xlu0 %314
          %vm316 = vcmp.lt.s32.totalorder %v110, 60
          %v317 = vsel %vm316, %v313, %v315
          %v318 = vsel %vm316, %v315, %v313
          %v319 = vsel %vm222, %v311, %v318
          %v320 = vsel %vm223, %v310, %v317
          %v323 = vrot.slane %v319, 4
          %v324 = vrot.slane %v320, 4
          %327 = vst [vmem:[%s107 + $0x30] sm:$0xf0] %v323
          %328 = vst [vmem:[%s107 + $0x38] sm:$0xf0] %v324
          %v329 = vld [vmem:[#allocation2] sm:$0xf]
          %v330 = vld [vmem:[#allocation2 + $0x8] sm:$0xf]
          %331 = vst [vmem:[%s107 + $0x40] sm:$0xf] %v330
          %332 = vst [vmem:[%s107 + $0x48] sm:$0xf] %v329
          %v333 = vld [vmem:[#allocation2] sm:$0xf0]
          %v334 = vld [vmem:[#allocation2 + $0x8] sm:$0xf0]
          %v337 = vrot.slane %v333, 4
          %v338 = vrot.slane %v334, 4
          %341 = vrot.lane.b32.xlu0 %v337, 4
          %v342 = vpop.permute.xlu0 %341
          %343 = vrot.lane.b32.xlu0 %v338, 4
          %v344 = vpop.permute.xlu0 %343
          %v345 = vsel %vm156, %v342, %v344
          %v346 = vsel %vm156, %v344, %v342
          %347 = vrot.lane.b32.xlu0 %v337, 116
          %v348 = vpop.permute.xlu0 %347
          %349 = vrot.lane.b32.xlu0 %v338, 116
          %v350 = vpop.permute.xlu0 %349
          %v351 = vsel %vm163, %v348, %v350
          %v352 = vsel %vm163, %v350, %v348
          %v353 = vsel %vm166, %v345, %v352
          %v354 = vsel %vm167, %v346, %v351
          %v357 = vrot.slane %v353, 4
          %v358 = vrot.slane %v354, 4
          %361 = vst [vmem:[%s107 + $0x40] sm:$0xf0] %v357
          %362 = vst [vmem:[%s107 + $0x48] sm:$0xf0] %v358
          %v363 = vld [vmem:[#allocation2] sm:$0xf]
          %v364 = vld [vmem:[#allocation2 + $0x8] sm:$0xf]
          %365 = vrot.lane.b32.xlu0 %v363, 8
          %v366 = vpop.permute.xlu0 %365
          %367 = vrot.lane.b32.xlu0 %v364, 8
          %v368 = vpop.permute.xlu0 %367
          %v369 = vsel %vm184, %v366, %v368
          %v370 = vsel %vm184, %v368, %v366
          %371 = vrot.lane.b32.xlu0 %v363, 120
          %v372 = vpop.permute.xlu0 %371
          %373 = vrot.lane.b32.xlu0 %v364, 120
          %v374 = vpop.permute.xlu0 %373
          %v375 = vsel %vm191, %v372, %v374
          %v376 = vsel %vm191, %v374, %v372
          %v377 = vsel %vm194, %v369, %v376
          %v378 = vsel %vm195, %v370, %v375
          %379 = vst [vmem:[%s107 + $0x50] sm:$0xf] %v377
          %380 = vst [vmem:[%s107 + $0x58] sm:$0xf] %v378
          %v381 = vld [vmem:[#allocation2] sm:$0xf0]
          %v382 = vld [vmem:[#allocation2 + $0x8] sm:$0xf0]
          %v385 = vrot.slane %v381, 4
          %v386 = vrot.slane %v382, 4
          %389 = vrot.lane.b32.xlu0 %v385, 12
          %v390 = vpop.permute.xlu0 %389
          %391 = vrot.lane.b32.xlu0 %v386, 12
          %v392 = vpop.permute.xlu0 %391
          %v393 = vsel %vm212, %v390, %v392
          %v394 = vsel %vm212, %v392, %v390
          %395 = vrot.lane.b32.xlu0 %v385, 124
          %v396 = vpop.permute.xlu0 %395
          %397 = vrot.lane.b32.xlu0 %v386, 124
          %v398 = vpop.permute.xlu0 %397
          %v399 = vsel %vm219, %v396, %v398
          %v400 = vsel %vm219, %v398, %v396
          %v401 = vsel %vm222, %v393, %v400
          %v402 = vsel %vm223, %v394, %v399
          %v405 = vrot.slane %v401, 4
          %v406 = vrot.slane %v402, 4
          %409 = vst [vmem:[%s107 + $0x50] sm:$0xf0] %v405
          %410 = vst [vmem:[%s107 + $0x58] sm:$0xf0] %v406
          %v411 = vld [vmem:[#allocation2] sm:$0xf]
          %v412 = vld [vmem:[#allocation2 + $0x8] sm:$0xf]
          %413 = vrot.lane.b32.xlu0 %v411, 64
          %v414 = vpop.permute.xlu0 %413
          %415 = vrot.lane.b32.xlu0 %v412, 64
          %v416 = vpop.permute.xlu0 %415
          %v417 = vsel %vm240, %v414, %v416
          %v418 = vsel %vm240, %v416, %v414
          %419 = vst [vmem:[%s107 + $0x60] sm:$0xf] %v417
          %420 = vst [vmem:[%s107 + $0x68] sm:$0xf] %v418
          %v421 = vld [vmem:[#allocation2] sm:$0xf0]
          %v422 = vld [vmem:[#allocation2 + $0x8] sm:$0xf0]
          %v425 = vrot.slane %v421, 4
          %v426 = vrot.slane %v422, 4
          %429 = vrot.lane.b32.xlu0 %v425, 68
          %v430 = vpop.permute.xlu0 %429
          %431 = vrot.lane.b32.xlu0 %v426, 68
          %v432 = vpop.permute.xlu0 %431
          %v433 = vsel %vm257, %v430, %v432
          %v434 = vsel %vm257, %v432, %v430
          %435 = vrot.lane.b32.xlu0 %v425, 52
          %v436 = vpop.permute.xlu0 %435
          %437 = vrot.lane.b32.xlu0 %v426, 52
          %v438 = vpop.permute.xlu0 %437
          %v439 = vsel %vm264, %v436, %v438
          %v440 = vsel %vm264, %v438, %v436
          %v441 = vsel %vm166, %v433, %v439
          %v442 = vsel %vm167, %v434, %v440
          %v445 = vrot.slane %v441, 4
          %v446 = vrot.slane %v442, 4
          %449 = vst [vmem:[%s107 + $0x60] sm:$0xf0] %v445
          %450 = vst [vmem:[%s107 + $0x68] sm:$0xf0] %v446
          %v451 = vld [vmem:[#allocation2] sm:$0xf]
          %v452 = vld [vmem:[#allocation2 + $0x8] sm:$0xf]
          %453 = vrot.lane.b32.xlu0 %v451, 72
          %v454 = vpop.permute.xlu0 %453
          %455 = vrot.lane.b32.xlu0 %v452, 72
          %v456 = vpop.permute.xlu0 %455
          %v457 = vsel %vm283, %v454, %v456
          %v458 = vsel %vm283, %v456, %v454
          %459 = vrot.lane.b32.xlu0 %v451, 56
          %v460 = vpop.permute.xlu0 %459
          %461 = vrot.lane.b32.xlu0 %v452, 56
          %v462 = vpop.permute.xlu0 %461
          %v463 = vsel %vm290, %v460, %v462
          %v464 = vsel %vm290, %v462, %v460
          %v465 = vsel %vm194, %v457, %v463
          %v466 = vsel %vm195, %v458, %v464
          %467 = vst [vmem:[%s107 + $0x70] sm:$0xf] %v465
          %468 = vst [vmem:[%s107 + $0x78] sm:$0xf] %v466
          %v469 = vld [vmem:[#allocation2] sm:$0xf0]
          %v470 = vld [vmem:[#allocation2 + $0x8] sm:$0xf0]
          %v473 = vrot.slane %v469, 4
          %v474 = vrot.slane %v470, 4
          %477 = vrot.lane.b32.xlu0 %v473, 76
          %v478 = vpop.permute.xlu0 %477
          %479 = vrot.lane.b32.xlu0 %v474, 76
          %v480 = vpop.permute.xlu0 %479
          %v481 = vsel %vm309, %v478, %v480
          %v482 = vsel %vm309, %v480, %v478
          %483 = vrot.lane.b32.xlu0 %v473, 60
          %v484 = vpop.permute.xlu0 %483
          %485 = vrot.lane.b32.xlu0 %v474, 60
          %v486 = vpop.permute.xlu0 %485
          %v487 = vsel %vm316, %v484, %v486
          %v488 = vsel %vm316, %v486, %v484
          %v489 = vsel %vm222, %v481, %v487
          %v490 = vsel %vm223, %v482, %v488
          %v493 = vrot.slane %v489, 4
          %v494 = vrot.slane %v490, 4
          %497 = vst [vmem:[%s107 + $0x70] sm:$0xf0] %v493
          %498 = vst [vmem:[%s107 + $0x78] sm:$0xf0] %v494
        $region32: #{tpu_custom_call.1} parent=23 // pred_fallthru
          _
        %p499 = scmp.eq.s32.totalorder %s16, 1
        // Predicated region
        $region33: #{tpu_custom_call.1} parent=23 // pred_check
          %p500 = pneg %p499
        $region34: #{tpu_custom_call.1} parent=23 // pred_check_branch
          %502 = sbr.rel (%p500) target = $region36
        $region35: #{tpu_custom_call.1} parent=23 // pred_region
          %v503 = vld [vmem:[#allocation2] sm:$0xf]
          %v504 = vld [vmem:[#allocation2 + $0x8] sm:$0xf]
          %505 = vst [vmem:[%s107] sm:$0xf] %v503
          %506 = vst [vmem:[%s107 + $0x8] sm:$0xf] %v504
          %v507 = vld [vmem:[#allocation2] sm:$0xf0]
          %v508 = vld [vmem:[#allocation2 + $0x8] sm:$0xf0]
          %509 = vst [vmem:[%s107] sm:$0xf0] %v507
          %510 = vst [vmem:[%s107 + $0x8] sm:$0xf0] %v508
          %v511 = vld [vmem:[#allocation2] sm:$0xf]
          %v512 = vld [vmem:[#allocation2 + $0x8] sm:$0xf]
          %513 = vst [vmem:[%s107 + $0x10] sm:$0xf] %v511
          %514 = vst [vmem:[%s107 + $0x18] sm:$0xf] %v512
          %v515 = vld [vmem:[#allocation2] sm:$0xf0]
          %v516 = vld [vmem:[#allocation2 + $0x8] sm:$0xf0]
          %517 = vst [vmem:[%s107 + $0x10] sm:$0xf0] %v515
          %518 = vst [vmem:[%s107 + $0x18] sm:$0xf0] %v516
          %v519 = vld [vmem:[#allocation2] sm:$0xf]
          %v520 = vld [vmem:[#allocation2 + $0x8] sm:$0xf]
          %521 = vst [vmem:[%s107 + $0x20] sm:$0xf] %v519
          %522 = vst [vmem:[%s107 + $0x28] sm:$0xf] %v520
          %v523 = vld [vmem:[#allocation2] sm:$0xf0]
          %v524 = vld [vmem:[#allocation2 + $0x8] sm:$0xf0]
          %525 = vst [vmem:[%s107 + $0x20] sm:$0xf0] %v523
          %526 = vst [vmem:[%s107 + $0x28] sm:$0xf0] %v524
          %v527 = vld [vmem:[#allocation2] sm:$0xf]
          %v528 = vld [vmem:[#allocation2 + $0x8] sm:$0xf]
          %529 = vst [vmem:[%s107 + $0x30] sm:$0xf] %v527
          %530 = vst [vmem:[%s107 + $0x38] sm:$0xf] %v528
          %v531 = vld [vmem:[#allocation2] sm:$0xf0]
          %v532 = vld [vmem:[#allocation2 + $0x8] sm:$0xf0]
          %533 = vst [vmem:[%s107 + $0x30] sm:$0xf0] %v531
          %534 = vst [vmem:[%s107 + $0x38] sm:$0xf0] %v532
          %v535 = vld [vmem:[#allocation2] sm:$0xf]
          %v536 = vld [vmem:[#allocation2 + $0x8] sm:$0xf]
          %537 = vst [vmem:[%s107 + $0x40] sm:$0xf] %v535
          %538 = vst [vmem:[%s107 + $0x48] sm:$0xf] %v536
          %v539 = vld [vmem:[#allocation2] sm:$0xf0]
          %v540 = vld [vmem:[#allocation2 + $0x8] sm:$0xf0]
          %541 = vst [vmem:[%s107 + $0x40] sm:$0xf0] %v539
          %542 = vst [vmem:[%s107 + $0x48] sm:$0xf0] %v540
          %v543 = vld [vmem:[#allocation2] sm:$0xf]
          %v544 = vld [vmem:[#allocation2 + $0x8] sm:$0xf]
          %545 = vst [vmem:[%s107 + $0x50] sm:$0xf] %v543
          %546 = vst [vmem:[%s107 + $0x58] sm:$0xf] %v544
          %v547 = vld [vmem:[#allocation2] sm:$0xf0]
          %v548 = vld [vmem:[#allocation2 + $0x8] sm:$0xf0]
          %549 = vst [vmem:[%s107 + $0x50] sm:$0xf0] %v547
          %550 = vst [vmem:[%s107 + $0x58] sm:$0xf0] %v548
          %v551 = vld [vmem:[#allocation2] sm:$0xf]
          %v552 = vld [vmem:[#allocation2 + $0x8] sm:$0xf]
          %553 = vst [vmem:[%s107 + $0x60] sm:$0xf] %v551
          %554 = vst [vmem:[%s107 + $0x68] sm:$0xf] %v552
          %v555 = vld [vmem:[#allocation2] sm:$0xf0]
          %v556 = vld [vmem:[#allocation2 + $0x8] sm:$0xf0]
          %557 = vst [vmem:[%s107 + $0x60] sm:$0xf0] %v555
          %558 = vst [vmem:[%s107 + $0x68] sm:$0xf0] %v556
          %v559 = vld [vmem:[#allocation2] sm:$0xf]
          %v560 = vld [vmem:[#allocation2 + $0x8] sm:$0xf]
          %561 = vst [vmem:[%s107 + $0x70] sm:$0xf] %v559
          %562 = vst [vmem:[%s107 + $0x78] sm:$0xf] %v560
          %v563 = vld [vmem:[#allocation2] sm:$0xf0]
          %v564 = vld [vmem:[#allocation2 + $0x8] sm:$0xf0]
          %565 = vst [vmem:[%s107 + $0x70] sm:$0xf0] %v563
          %566 = vst [vmem:[%s107 + $0x78] sm:$0xf0] %v564
        $region36: #{tpu_custom_call.1} parent=23 // pred_fallthru
          _
        %s567 = sand.u32 %s45, 1
        %s568 = scalar_lea.sflag [#allocation4], %s567
        %s569 = sand.u32 %s45, 1
        %s570 = smul.addr %s569, 128
        %s571 = scalar_lea.vmem [#allocation5], %s570
        // Predicated region
        $region37: #{tpu_custom_call.1} parent=23 // pred_check
          %p572 = pneg %p55
        $region38: #{tpu_custom_call.1} parent=23 // pred_check_branch
          %574 = sbr.rel (%p572) target = $region40
        $region39: #{tpu_custom_call.1} parent=23 // pred_region
          %s575 = smul.u32 8, %s16
          %s577 = ssub.s32 2048, 2048
          %578 = vsyncadd %s568, %s577
          %s579 = smul.addr %s575, 2
          %s580 = smul.addr %s579, 128
          %s581 = scalar_lea.hbm %s1, %s580
          %s582 = sshll.u32 %s571, 4
          %s583 = int_to_ptr.vmem [resolvable:$true] %s582
          %588 = dma.vmem_to_hbm [thread:$0]  %s583, 2048, %s581, %s568, 256, 256, 16
        $region40: #{tpu_custom_call.1} parent=23 // pred_fallthru
          _
      $region24: #{tpu_custom_call.1} parent=5 // pred_fallthru
        _
      %p589 = scmp.le.s32.totalorder 2, %s11
      // Predicated region
      $region41: #{tpu_custom_call.1} parent=5 // pred_check
        %p590 = pneg %p589
      $region42: #{tpu_custom_call.1} parent=5 // pred_check_branch
        %592 = sbr.rel (%p590) target = $region44
      $region43: #{tpu_custom_call.1} parent=5 // pred_region
        %s593 = ssub.s32 %s11, 2
        // Predicated region
        $region45: #{tpu_custom_call.1} parent=43 // pred_check
          %p594 = pneg %p61
        $region46: #{tpu_custom_call.1} parent=43 // pred_check_branch
          %596 = sbr.rel (%p594) target = $region48
        $region47: #{tpu_custom_call.1} parent=43 // pred_region
          %s597 = sand.u32 %s46, 1
          %s598 = scalar_lea.sflag [#allocation4], %s597
          %s599 = sand.u32 %s46, 1
          %s600 = smul.addr %s599, 128
          %s601 = scalar_lea.vmem [#allocation5], %s600
          %602 = dma.done %s598, 2048
        $region48: #{tpu_custom_call.1} parent=43 // pred_fallthru
          _
      $region44: #{tpu_custom_call.1} parent=5 // pred_fallthru
        _
    $region6: #{tpu_custom_call.1} parent=1 // loop_footer
      %s15 = sadd.s32 1, %s11
    $region7: #{tpu_custom_call.1} parent=1 // loop_footer_branch
      %10 = sbr.rel target = $region3
    $region8: #{tpu_custom_call.1} parent=1 // loop_exit
      _
    %603 = vsyncpa [#allocation3], 1
    %s604 = scalar_lea.sflag [#allocation3], 1
    %605 = vsyncpa %s604, 1
    %606 = vsyncpa [#allocation4], 1
    %s607 = scalar_lea.sflag [#allocation4], 1
    %608 = vsyncpa %s607, 1

</llo_original>
